<compile_context>
chip_gen: v6e
topology: v6e:2x2x1
jax: 0.10.0
libtpu: 0.0.40
codegen_flags: <defaults>
</compile_context>

<pallas_src>
import math

import jax
import jax.numpy as jnp
from jax.experimental import pallas as pl
from jax.experimental.pallas import tpu as pltpu


def _round_up(x, m):
    return ((x + m - 1) // m) * m


# ------------------------------ kernels ------------------------------------ #
def ramp_filter_kernel(x_ref, fmat_ref, out_ref):
    # x_ref:    (1, NC, D)  one angle's projections for all (n, c)
    # fmat_ref: (D, D)      ramp-filter circular-conv matrix, fmat[e, d]
    # out_ref:  (1, D, NC)  filtered projections, detector-major (bf16)
    xa = x_ref[0].astype(jnp.float32)                         # (NC, D)
    y = jax.lax.dot_general(
        fmat_ref[...], xa,
        dimension_numbers=(((0,), (1,)), ((), ())),
        preferred_element_type=jnp.float32)                   # (D, NC)
    out_ref[0] = y.astype(out_ref.dtype)


def backproject_kernel(xg_ref, yg_ref, ms_ref, cos_ref, sin_ref, c0_ref,
                       m2_ref, out_ref, acc_ref):
    # xg/yg/ms: (tile_P, 1)  per-pixel constants (ms = circle mask * pi/(2A))
    # cos/sin/c0: (1, tile_Q) per-q constants (q = a*D + d)
    # m2:       (tile_Q, NC)  filtered sinogram (bf16), columns = batch*channel
    # out:      (tile_P, NC)  reconstruction rows for this pixel tile
    # acc:      (tile_P, NC)  f32 accumulator scratch (persists over Q tiles)
    qt = pl.program_id(1)

    @pl.when(qt == 0)
    def _init():
        acc_ref[...] = jnp.zeros_like(acc_ref)

    # iy - d for every (pixel, q) pair; 4 VPU ops per element.
    iy_m_d = (xg_ref[...] * cos_ref[...]
              - yg_ref[...] * sin_ref[...]
              + c0_ref[...])                                  # (tile_P, tile_Q)
    # bilinear "hat" weight == grid_sample(align_corners=True, zeros padding)
    w = jnp.maximum(0.0, 1.0 - jnp.abs(iy_m_d)).astype(jnp.bfloat16)

    acc_ref[...] += jnp.dot(w, m2_ref[...],
                            preferred_element_type=jnp.float32)

    @pl.when(qt == pl.num_programs(1) - 1)
    def _finalize():
        out_ref[...] = (acc_ref[...] * ms_ref[...]).astype(out_ref.dtype)


# ------------------------- parameter setup (glue) -------------------------- #
def ramp_filter_matrix(in_size):
    """(D, D) matrix M with (x @ M)[d] == RampFilter()(x)[d] along detector."""
    padded = max(64, int(2 ** math.ceil(math.log2(2 * in_size))))
    freqs = jnp.fft.fftfreq(padded)
    h = 2.0 * jnp.abs(freqs)                         # RampFilter.create_filter
    g = jnp.real(jnp.fft.ifft(h))                    # impulse response
    e = jnp.arange(in_size)[:, None]
    d = jnp.arange(in_size)[None, :]
    return g[(d - e) % padded].astype(jnp.float32)   # fmat[e, d]


def _pick_tiles(P, Q):
    """Per-chip tile sizes + scoped-VMEM limit for the backprojection."""
    try:
        vmem = pltpu.get_tpu_info().vmem_capacity_bytes
    except Exception:
        vmem = 64 * 1024 * 1024
    big_vmem = vmem >= (100 << 20)        # v5e/v6e: 128 MiB; v7x: 64 MiB
    cap = 1024 if big_vmem else 512
    tile_p = min(cap, _round_up(P, 8))
    tile_q = min(cap, _round_up(Q, 128))
    vmem_limit = (64 << 20) if big_vmem else (32 << 20)
    return tile_p, tile_q, vmem_limit


# ------------------------------- wrapper ----------------------------------- #
def iradon(x, theta, out_size, circle=True):
    """x: (N, C, in_size, len(theta)) sinogram (PyTorch NCHW). Returns
    (N, C, out_size, out_size) reconstruction, matching IRadon.forward."""
    if not circle:
        # TODO(synk): circle=False path (sqrt(2)-padded in_size + center crop)
        raise NotImplementedError("circle=False not implemented")
    N, C, D, A = x.shape
    assert D == out_size and A == theta.shape[0]
    NC = N * C
    P, Q = D * D, A * D
    f32 = jnp.float32

    # ---- stage 1: ramp filter (Pallas), output shaped as (Q, NC) RHS ----
    fmat = ramp_filter_matrix(D)                                 # (D, D)
    x_t = jnp.transpose(x.astype(f32), (3, 0, 1, 2)).reshape(A, NC, D)
    filt = pl.pallas_call(
        ramp_filter_kernel,
        out_shape=jax.ShapeDtypeStruct((A, D, NC), jnp.bfloat16),
        grid_spec=pltpu.PrefetchScalarGridSpec(
            num_scalar_prefetch=0,
            grid=(A,),
            in_specs=[pl.BlockSpec((1, NC, D), lambda a: (a, 0, 0)),
                      pl.BlockSpec((D, D), lambda a: (0, 0))],
            out_specs=pl.BlockSpec((1, D, NC), lambda a: (a, 0, 0))),
        compiler_params=pltpu.CompilerParams(
            dimension_semantics=("parallel",)),
    )(x_t, fmat)
    m2 = filt.reshape(Q, NC)                                     # q = a*D + d

    # ---- stage 2: batch-invariant geometry constants (host glue) ----
    tile_p, tile_q, vmem_limit = _pick_tiles(P, Q)
    P_pad = _round_up(P, tile_p)
    Q_pad = _round_up(Q, tile_q)

    hf = (D - 1) / 2.0                                           # align_corners
    grid1d = jnp.linspace(-1.0, 1.0, D).astype(f32)
    rad = jnp.deg2rad(theta.astype(f32))

    # per-q constants so that (iy - d) = xg*cos' - yg*sin' + c0
    cosq = jnp.repeat(jnp.cos(rad) * hf, D)
    sinq = jnp.repeat(jnp.sin(rad) * hf, D)
    c0q = hf - jnp.tile(jnp.arange(D, dtype=f32), A)
    cosq = jnp.pad(cosq, (0, Q_pad - Q)).reshape(1, Q_pad)
    sinq = jnp.pad(sinq, (0, Q_pad - Q)).reshape(1, Q_pad)
    c0q = jnp.pad(c0q, (0, Q_pad - Q)).reshape(1, Q_pad)
    m2 = jnp.pad(m2, ((0, Q_pad - Q), (0, 0)))                   # zero rows

    # per-pixel constants (p = i*D + j) + circle mask folded with pi/(2A)
    xg = jnp.tile(grid1d, D)                                     # xgrid[j]
    yg = jnp.repeat(grid1d, D)                                   # ygrid[i]
    ms = jnp.where(xg * xg + yg * yg <= 1.0,
                   math.pi / (2.0 * A), 0.0).astype(f32)
    xg = jnp.pad(xg, (0, P_pad - P)).reshape(P_pad, 1)
    yg = jnp.pad(yg, (0, P_pad - P)).reshape(P_pad, 1)
    ms = jnp.pad(ms, (0, P_pad - P)).reshape(P_pad, 1)

    # ---- stage 3: tiled backprojection (Pallas) ----
    out = pl.pallas_call(
        backproject_kernel,
        out_shape=jax.ShapeDtypeStruct((P_pad, NC), f32),
        grid_spec=pltpu.PrefetchScalarGridSpec(
            num_scalar_prefetch=0,
            grid=(P_pad // tile_p, Q_pad // tile_q),
            in_specs=[
                pl.BlockSpec((tile_p, 1), lambda i, k: (i, 0)),    # xg
                pl.BlockSpec((tile_p, 1), lambda i, k: (i, 0)),    # yg
                pl.BlockSpec((tile_p, 1), lambda i, k: (i, 0)),    # mask*scale
                pl.BlockSpec((1, tile_q), lambda i, k: (0, k)),    # cos*hf
                pl.BlockSpec((1, tile_q), lambda i, k: (0, k)),    # sin*hf
                pl.BlockSpec((1, tile_q), lambda i, k: (0, k)),    # hf - d
                pl.BlockSpec((tile_q, NC), lambda i, k: (k, 0)),   # filtered sino
            ],
            out_specs=pl.BlockSpec((tile_p, NC), lambda i, k: (i, 0)),
            scratch_shapes=[pltpu.VMEM((tile_p, NC), f32)]),
        compiler_params=pltpu.CompilerParams(
            dimension_semantics=("parallel", "arbitrary"),
            vmem_limit_bytes=vmem_limit),
    )(xg, yg, ms, cosq, sinq, c0q, m2)

    # (P, NC) -> (N, C, D, D)
    return out[:P].T.reshape(N, C, D, D)


# -------------------------------- main ------------------------------------- #
if __name__ == "__main__":
    key = jax.random.PRNGKey(0)
    N, C, out_size, n_theta = 2, 4, 16, 8
    theta = jnp.arange(n_theta, dtype=jnp.float32) * (180.0 / n_theta)
    # sinogram: (N, C, in_size, len(theta))
    x = jax.random.normal(key, (N, C, out_size, n_theta), dtype=jnp.float32)

    y = iradon(x, theta, out_size, circle=True)
    y = jax.block_until_ready(y)
    assert y.shape == (N, C, out_size, out_size)
    assert bool(jnp.all(jnp.isfinite(y)))
    print("KERNEL_OK")
</pallas_src>

<mosaic_0001>
module attributes {stable_mosaic.version = 11 : i64} {
  func.func @ramp_filter_kernel(%arg0: i32, %arg1: memref<1x8x16xf32, #tpu.memory_space<vmem>>, %arg2: memref<16x16xf32, #tpu.memory_space<vmem>>, %arg3: memref<1x16x8xbf16, #tpu.memory_space<vmem>>) attributes {dimension_semantics = [#tpu.dimension_semantics<parallel>], iteration_bounds = array<i64: 8>, scalar_prefetch = 0 : i64, scratch_operands = 0 : i64, tpu.core_type = #tpu.core_type<tc>, window_params = [{transform_indices = @transform_0, window_bounds = array<i64: 1, 8, 16>}, {pipeline_mode = #tpu.pipeline_mode<synchronous>, transform_indices = @transform_1, window_bounds = array<i64: 16, 16>}, {transform_indices = @transform_2, window_bounds = array<i64: 1, 16, 8>}]} {
    %c0 = arith.constant 0 : index
    %c0_0 = arith.constant 0 : index
    %c0_1 = arith.constant 0 : index
    %0 = vector.load %arg1[%c0, %c0_0, %c0_1] : memref<1x8x16xf32, #tpu.memory_space<vmem>>, vector<1x8x16xf32>
    %1 = vector.shape_cast %0 : vector<1x8x16xf32> to vector<8x16xf32>
    %c0_2 = arith.constant 0 : index
    %c0_3 = arith.constant 0 : index
    %2 = vector.load %arg2[%c0_2, %c0_3] : memref<16x16xf32, #tpu.memory_space<vmem>>, vector<16x16xf32>
    %cst = arith.constant dense<0.000000e+00> : vector<16x8xf32>
    %3 = tpu.matmul %2, %1, %cst {dimension_numbers = #tpu.dot_dimension_numbers<[0], [1], [1], [0], [0, 1, 1, 0], [], []>} : vector<16x16xf32>, vector<8x16xf32>, vector<16x8xf32> -> vector<16x8xf32>
    %4 = arith.truncf %3 : vector<16x8xf32> to vector<16x8xbf16>
    %c0_4 = arith.constant 0 : index
    %c0_5 = arith.constant 0 : index
    %c0_6 = arith.constant 0 : index
    %5 = vector.load %arg3[%c0_4, %c0_5, %c0_6] : memref<1x16x8xbf16, #tpu.memory_space<vmem>>, vector<1x16x8xbf16>
    %6 = vector.shape_cast %5 : vector<1x16x8xbf16> to vector<16x8xbf16>
    %7 = vector.shape_cast %4 : vector<16x8xbf16> to vector<1x16x8xbf16>
    tpu.vector_store %arg3[%c0_4, %c0_5, %c0_6], %7 {strides = array<i32>} : memref<1x16x8xbf16, #tpu.memory_space<vmem>>, vector<1x16x8xbf16>,
    return
  }
  func.func @transform_0(%arg0: i32) -> (i32, i32, i32) {
    %c0_i32 = arith.constant 0 : i32
    %c0_i32_0 = arith.constant 0 : i32
    %c0_i32_1 = arith.constant 0 : i32
    return %arg0, %c0_i32, %c0_i32_0 : i32, i32, i32
  }
  func.func @transform_1(%arg0: i32) -> (i32, i32) {
    %c0_i32 = arith.constant 0 : i32
    %c0_i32_0 = arith.constant 0 : i32
    %c0_i32_1 = arith.constant 0 : i32
    return %c0_i32, %c0_i32_0 : i32, i32
  }
  func.func @transform_2(%arg0: i32) -> (i32, i32, i32) {
    %c0_i32 = arith.constant 0 : i32
    %c0_i32_0 = arith.constant 0 : i32
    %c0_i32_1 = arith.constant 0 : i32
    return %arg0, %c0_i32, %c0_i32_0 : i32, i32, i32
  }
}

</mosaic_0001>

<llo_original>
// kernel: tpu_custom_call.1
$region0: #{tpu_custom_call.1}
  #allocation0 [shape = 'u32[]', space=smem, size = 0x4, offset = 0x4, fixed_abs, tag = 'smem constant byte address 0x4 - core index']
  #allocation1 [shape = 'u32[144,128]{1,0:T(1,128)}', space=vmem, size = 0x12000, scoped, tag = 'internal scratch']
  %s0 = inlined_call_operand.hbm [shape: f32[8,8,16], index: 0, kind: input, shape index: {}]
  %s1 = inlined_call_operand.hbm [shape: f32[16,16], index: 1, kind: input, shape index: {}]
  %s2 = inlined_call_operand.vmem [shape: bf16[8,16,8], index: 2, kind: output, shape index: {}]
  %s3 = sld [smem:[#allocation0]]
  $region49: #{tpu_custom_call.1} parent=0
    _
  %s5 = ssub.s32 1, %s3
  %s6 = scalar_select 0, %s5, %s3
  $region1: #{tpu_custom_call.1} parent=0
    #allocation2 [shape = 'u8[8192]{0}', space=vmem, size = 0x2000, scoped, tag = 'input window, operand 0']
    #allocation3 [shape = 's32[2]{0}', space=sflag, size = 0x8, scoped, tag = 'scoped memory for tpu_custom_call.1']
    #allocation4 [shape = 'u8[8192]{0}', space=vmem, size = 0x2000, scoped, tag = 'input window, operand 1, single buffered']
    #allocation5 [shape = 's32[1]{0}', space=sflag, size = 0x4, scoped, tag = 'scoped memory for tpu_custom_call.1']
    %7 = vsyncpa [#allocation3], 0
    %s8 = scalar_lea.sflag [#allocation3], 1
    %9 = vsyncpa %s8, 0
    %10 = vsyncpa [#allocation5], 0
    loop: start=0, step=1, limit=10
    $region2: #{tpu_custom_call.1} parent=1 // loop_pre_header
      _
    $region3: #{tpu_custom_call.1} parent=1 // loop_header
      %s12 = sphi 0, %s16
      %p13 = scmp.ge.s32.totalorder %s12, 10
      %s22 = sphi 0, %s24
      %s25 = sphi 0, %s22
      %s26 = sphi 0, %s25
      %s42 = sphi 0, %s26
      %s46 = sphi 0, %s46
      %s48 = sphi 0, %s46
      %s49 = sphi 0, %s48
      %s63 = sphi 0, %s49
      %s69 = sphi 0, %s71
      %s72 = sphi 0, %s69
      %s73 = sphi 0, %s72
      %s89 = sphi 0, %s73
    $region4: #{tpu_custom_call.1} parent=1 // loop_header_branch
      %15 = sbr.rel (%p13) target = $region8
    $region5: #{tpu_custom_call.1} parent=1 // loop_body
      %s17 = ssub.s32 %s12, 1
      %s18 = ssub.s32 %s12, 2
      %s19 = sadd.s32 %s12, 1
      %s20 = ssub.s32 %s12, %s19
      %p21 = scmp.eq.s32.totalorder %s20, 0
      %s23 = sadd.s32 %s22, 1
      %s24 = scalar_select %p21, %s22, %s23
      %p27 = pneg %p21
      %p28 = scmp.eq.s32.totalorder %s12, 7
      %p29 = por %p27, %p28
      %p30 = scmp.ne.s32.totalorder %s22, %s25
      %p31 = scmp.eq.s32.totalorder %s12, 0
      %p32 = por %p30, %p31
      %p33 = scmp.ne.s32.totalorder %s22, %s25
      %p34 = scmp.eq.s32.totalorder %s17, 7
      %p35 = por %p33, %p34
      %p36 = scmp.ne.s32.totalorder %s25, %s26
      %p37 = scmp.eq.s32.totalorder %s17, 0
      %p38 = por %p36, %p37
      %p39 = scmp.ne.s32.totalorder %s25, %s26
      %p40 = scmp.eq.s32.totalorder %s18, 7
      %p41 = por %p39, %p40
      %p43 = scmp.ne.s32.totalorder %s26, %s42
      %p44 = scmp.eq.s32.totalorder %s18, 0
      %p45 = por %p43, %p44
      %s47 = sadd.s32 %s46, 1
      %p50 = scmp.eq.s32.totalorder %s12, 7
      %p51 = scmp.ne.s32.totalorder %s46, %s48
      %p52 = scmp.eq.s32.totalorder %s12, 0
      %p53 = por %p51, %p52
      %p54 = scmp.ne.s32.totalorder %s46, %s48
      %p55 = scmp.eq.s32.totalorder %s17, 7
      %p56 = por %p54, %p55
      %p57 = scmp.ne.s32.totalorder %s48, %s49
      %p58 = scmp.eq.s32.totalorder %s17, 0
      %p59 = por %p57, %p58
      %p60 = scmp.ne.s32.totalorder %s48, %s49
      %p61 = scmp.eq.s32.totalorder %s18, 7
      %p62 = por %p60, %p61
      %p64 = scmp.ne.s32.totalorder %s49, %s63
      %p65 = scmp.eq.s32.totalorder %s18, 0
      %p66 = por %p64, %p65
      %s67 = ssub.s32 %s12, %s19
      %p68 = scmp.eq.s32.totalorder %s67, 0
      %s70 = sadd.s32 %s69, 1
      %s71 = scalar_select %p68, %s69, %s70
      %p74 = pneg %p68
      %p75 = scmp.eq.s32.totalorder %s12, 7
      %p76 = por %p74, %p75
      %p77 = scmp.ne.s32.totalorder %s69, %s72
      %p78 = scmp.eq.s32.totalorder %s12, 0
      %p79 = por %p77, %p78
      %p80 = scmp.ne.s32.totalorder %s69, %s72
      %p81 = scmp.eq.s32.totalorder %s17, 7
      %p82 = por %p80, %p81
      %p83 = scmp.ne.s32.totalorder %s72, %s73
      %p84 = scmp.eq.s32.totalorder %s17, 0
      %p85 = por %p83, %p84
      %p86 = scmp.ne.s32.totalorder %s72, %s73
      %p87 = scmp.eq.s32.totalorder %s18, 7
      %p88 = por %p86, %p87
      %p90 = scmp.ne.s32.totalorder %s73, %s89
      %p91 = scmp.eq.s32.totalorder %s18, 0
      %p92 = por %p90, %p91
      %p93 = scmp.le.s32.totalorder 1, %s12
      %p94 = scmp.lt.s32.totalorder %s12, 9
      %p95 = pnand %p93, %p94
      %p96 = pneg %p95
      // Predicated region
      $region9: #{tpu_custom_call.1} parent=5 // pred_check
        _
      $region10: #{tpu_custom_call.1} parent=5 // pred_check_branch
        %98 = sbr.rel (%p95) target = $region12
      $region11: #{tpu_custom_call.1} parent=5 // pred_region
        %s99 = ssub.s32 %s12, 1
        // Predicated region
        $region13: #{tpu_custom_call.1} parent=11 // pred_check
          %p100 = pneg %p59
        $region14: #{tpu_custom_call.1} parent=11 // pred_check_branch
          %102 = sbr.rel (%p100) target = $region16
        $region15: #{tpu_custom_call.1} parent=11 // pred_region
          %s104 = ssub.s32 256, 256
          %105 = vsyncadd [#allocation5], %s104
          %s106 = sshll.u32 [#allocation4], 4
          %s107 = int_to_ptr.vmem [resolvable:$true] %s106
          %112 = dma.hbm_to_vmem [thread:$0]  %s1, 256, %s107, [#allocation5], 128, 128, 8
        $region16: #{tpu_custom_call.1} parent=11 // pred_fallthru
          _
      $region12: #{tpu_custom_call.1} parent=5 // pred_fallthru
        _
      %p113 = scmp.lt.s32.totalorder %s12, 8
      // Predicated region
      $region17: #{tpu_custom_call.1} parent=5 // pred_check
        %p114 = pneg %p113
      $region18: #{tpu_custom_call.1} parent=5 // pred_check_branch
        %116 = sbr.rel (%p114) target = $region20
      $region19: #{tpu_custom_call.1} parent=5 // pred_region
        // Predicated region
        $region21: #{tpu_custom_call.1} parent=19 // pred_check
          %p117 = pneg %p32
        $region22: #{tpu_custom_call.1} parent=19 // pred_check_branch
          %119 = sbr.rel (%p117) target = $region24
        $region23: #{tpu_custom_call.1} parent=19 // pred_region
          %s120 = sand.u32 %s22, 1
          %s121 = scalar_lea.sflag [#allocation3], %s120
          %s122 = sand.u32 %s22, 1
          %s123 = smul.addr %s122, 8
          %s124 = scalar_lea.vmem [#allocation2], %s123
          %s126 = ssub.s32 128, 128
          %127 = vsyncadd %s121, %s126
          %s128 = smul.addr %s12, 128
          %s129 = scalar_lea.hbm %s0, %s128
          %s131 = sshll.u32 %s124, 4
          %s132 = int_to_ptr.vmem [resolvable:$true] %s131
          %134 = dma.hbm_to_vmem [thread:$0]  %s129, 128, %s132, %s121
        $region24: #{tpu_custom_call.1} parent=19 // pred_fallthru
          _
      $region20: #{tpu_custom_call.1} parent=5 // pred_fallthru
        _
      %p135 = scmp.le.s32.totalorder 1, %s12
      %p136 = scmp.lt.s32.totalorder %s12, 9
      %p137 = pnand %p135, %p136
      %p138 = pneg %p137
      // Predicated region
      $region25: #{tpu_custom_call.1} parent=5 // pred_check
        _
      $region26: #{tpu_custom_call.1} parent=5 // pred_check_branch
        %140 = sbr.rel (%p137) target = $region28
      $region27: #{tpu_custom_call.1} parent=5 // pred_region
        %s141 = ssub.s32 %s12, 1
        %s142 = sand.u32 %s25, 1
        %s143 = scalar_lea.sflag [#allocation3], %s142
        %s144 = sand.u32 %s25, 1
        %s145 = smul.addr %s144, 8
        %s146 = scalar_lea.vmem [#allocation2], %s145
        // Predicated region
        $region29: #{tpu_custom_call.1} parent=27 // pred_check
          %p147 = pneg %p38
        $region30: #{tpu_custom_call.1} parent=27 // pred_check_branch
          %149 = sbr.rel (%p147) target = $region32
        $region31: #{tpu_custom_call.1} parent=27 // pred_region
          %150 = dma.done %s143, 128
        $region32: #{tpu_custom_call.1} parent=27 // pred_fallthru
          _
        // Predicated region
        $region33: #{tpu_custom_call.1} parent=27 // pred_check
          %p151 = pneg %p59
        $region34: #{tpu_custom_call.1} parent=27 // pred_check_branch
          %153 = sbr.rel (%p151) target = $region36
        $region35: #{tpu_custom_call.1} parent=27 // pred_region
          %154 = dma.done [#allocation5], 256
        $region36: #{tpu_custom_call.1} parent=27 // pred_fallthru
          _
        %s155 = sand.u32 %s25, 1
        %s156 = scalar_lea.sflag [#allocation3], %s155
        %s157 = sand.u32 %s25, 1
        %s158 = smul.addr %s157, 8
        %s159 = scalar_lea.vmem [#allocation2], %s158
        %p160 = pneg %p38
        %p161 = pneg %p35
        %p162 = pneg %p59
        %p163 = pneg %p56
        %p164 = pneg %p85
        %p165 = pneg %p82
        %p166 = scmp.lt.s32.totalorder %s17, 7
        %s167 = scalar_select %p166, %s17, 7
        %s168 = smul.addr %s167, 2
        %s169 = smul.addr %s168, 4
        %s170 = scalar_lea.vmem %s2, %s169
        %p171 = scmp.lt.s32.totalorder %s17, 7
        %s172 = scalar_select %p171, %s17, 7
        %s173 = smul.addr %s172, 2
        %s174 = smul.addr %s173, 4
        %s175 = scalar_lea.vmem %s2, %s174
        %v176 = vld [vmem:[%s146] sm:$0xff]
        %v177 = vld [vmem:[#allocation4] sm:$0xff]
        %v178 = vld [vmem:[#allocation4 + $0x8] sm:$0xff]
        %179 = vxpose.xlu0.b32.start [1/16] %v177, 128
        %180 = vxpose.xlu0.b32.cont [2/16] %v178, 128
        %181 = vxpose.xlu0.b32.cont [3/16] 0.0, 128
        %182 = vxpose.xlu0.b32.cont [4/16] 0.0, 128
        %183 = vxpose.xlu0.b32.cont [5/16] 0.0, 128
        %184 = vxpose.xlu0.b32.cont [6/16] 0.0, 128
        %185 = vxpose.xlu0.b32.cont [7/16] 0.0, 128
        %186 = vxpose.xlu0.b32.cont [8/16] 0.0, 128
        %187 = vxpose.xlu0.b32.cont [9/16] 0.0, 128
        %188 = vxpose.xlu0.b32.cont [10/16] 0.0, 128
        %189 = vxpose.xlu0.b32.cont [11/16] 0.0, 128
        %190 = vxpose.xlu0.b32.cont [12/16] 0.0, 128
        %191 = vxpose.xlu0.b32.cont [13/16] 0.0, 128
        %192 = vxpose.xlu0.b32.cont [14/16] 0.0, 128
        %193 = vxpose.xlu0.b32.cont [15/16] 0.0, 128
        %194 = vxpose.xlu0.b32.end [16/16] 0.0, 128
        %v195 = vpop.trf.xlu0
        %v196 = vpop.trf.xlu0
        %v197 = vpop.trf.xlu0
        %v198 = vpop.trf.xlu0
        %v199 = vpop.trf.xlu0
        %v200 = vpop.trf.xlu0
        %v201 = vpop.trf.xlu0
        %v202 = vpop.trf.xlu0
        %v203 = vpop.trf.xlu0
        %v204 = vpop.trf.xlu0
        %v205 = vpop.trf.xlu0
        %v206 = vpop.trf.xlu0
        %v207 = vpop.trf.xlu0
        %v208 = vpop.trf.xlu0
        %v209 = vpop.trf.xlu0
        %v210 = vpop.trf.xlu0
        %vm211 = vcmask 130048
        %v213 = vsel %vm211, %v195, 0
        %v216 = vsel %vm211, %v196, 0
        %v219 = vsel %vm211, %v176, 0
        %221 = vmatprep.subr.mxu0 0.0
        %222 = vmatpush1.xpose.msra.mxu0 0.0
        %223 = vmatprep.subr.mxu0 0.0
        %224 = vmatpush1.xpose.msra.mxu0 0.0
        %225 = vmatprep.subr.mxu0 0.0
        %226 = vmatpush1.xpose.msra.mxu0 0.0
        %227 = vmatprep.subr.mxu0 0.0
        %228 = vmatpush1.xpose.msra.mxu0 0.0
        %229 = vmatprep.subr.mxu0 0.0
        %230 = vmatpush1.xpose.msra.mxu0 0.0
        %231 = vmatprep.subr.mxu0 0.0
        %232 = vmatpush1.xpose.msra.mxu0 0.0
        %233 = vmatprep.subr.mxu0 0.0
        %234 = vmatpush1.xpose.msra.mxu0 0.0
        %235 = vmatprep.subr.mxu0 0.0
        %236 = vmatpush1.xpose.msra.mxu0 0.0
        %237 = vmatprep.subr.mxu0 0.0
        %238 = vmatpush1.xpose.msra.mxu0 0.0
        %239 = vmatprep.subr.mxu0 0.0
        %240 = vmatpush1.xpose.msra.mxu0 0.0
        %241 = vmatprep.subr.mxu0 0.0
        %242 = vmatpush1.xpose.msra.mxu0 0.0
        %243 = vmatprep.subr.mxu0 0.0
        %244 = vmatpush1.xpose.msra.mxu0 0.0
        %245 = vmatprep.subr.mxu0 0.0
        %246 = vmatpush1.xpose.msra.mxu0 0.0
        %247 = vmatprep.subr.mxu0 0.0
        %248 = vmatpush1.xpose.msra.mxu0 0.0
        %249 = vmatprep.subr.mxu0 0.0
        %250 = vmatpush1.xpose.msra.mxu0 0.0
        %251 = vmatprep.subr.mxu0 0.0
        %252 = vmatpush1.xpose.msra.mxu0 %v219
        %253 = vmatprep.subr.mxu0 0.0
        %254 = vmatpush2.xpose.msra.mxu0 0.0
        %255 = vmatprep.subr.mxu0 0.0
        %256 = vmatpush2.xpose.msra.mxu0 0.0
        %257 = vmatprep.subr.mxu0 0.0
        %258 = vmatpush2.xpose.msra.mxu0 0.0
        %259 = vmatprep.subr.mxu0 0.0
        %260 = vmatpush2.xpose.msra.mxu0 0.0
        %261 = vmatprep.subr.mxu0 0.0
        %262 = vmatpush2.xpose.msra.mxu0 0.0
        %263 = vmatprep.subr.mxu0 0.0
        %264 = vmatpush2.xpose.msra.mxu0 0.0
        %265 = vmatprep.subr.mxu0 0.0
        %266 = vmatpush2.xpose.msra.mxu0 0.0
        %267 = vmatprep.subr.mxu0 0.0
        %268 = vmatpush2.xpose.msra.mxu0 0.0
        %269 = vmatprep.subr.mxu0 0.0
        %270 = vmatpush2.xpose.msra.mxu0 0.0
        %271 = vmatprep.subr.mxu0 0.0
        %272 = vmatpush2.xpose.msra.mxu0 0.0
        %273 = vmatprep.subr.mxu0 0.0
        %274 = vmatpush2.xpose.msra.mxu0 0.0
        %275 = vmatprep.subr.mxu0 0.0
        %276 = vmatpush2.xpose.msra.mxu0 0.0
        %277 = vmatprep.subr.mxu0 0.0
        %278 = vmatpush2.xpose.msra.mxu0 0.0
        %279 = vmatprep.subr.mxu0 0.0
        %280 = vmatpush2.xpose.msra.mxu0 0.0
        %281 = vmatprep.subr.mxu0 0.0
        %282 = vmatpush2.xpose.msra.mxu0 0.0
        %283 = vmatprep.subr.mxu0 0.0
        %284 = vmatpush2.xpose.msra.mxu0 0.0
        %285 = vmatprep.mubr.f32.mxu0 0.0
        %286 = vmatmul.mubr.f32.gmra.mxu0 %v213
        %v287 = vpop.f32.mrf.mxu0
        %v288 = vadd.f32 0.0, %v287
        %v289 = vpop.f32.mrf.mxu0
        %290 = vmatprep.mubr.f32.mxu0 0.0
        %291 = vmatmul.mubr.f32.gmra.mxu0 %v216
        %v292 = vpop.f32.mrf.mxu0
        %v293 = vadd.f32 0.0, %v292
        %v294 = vpop.f32.mrf.mxu0
        %295 = vdwg.mxu0
        %v296 = vpack.c.bf16 %v293, %v288
        %v298 = vunpack.c.l.b16 %v296
        %v299 = vunpack.c.h.b16 %v296
        %v300 = vpack.c.b16 %v298, %v298
        %v301 = vpack.c.b16 %v299, %v299
        %vm304 = vcmask 60416
        %305 = vst.msk [vmem:[%s175] sm:$0xf] %vm304, %v300
        %306 = vst.msk [vmem:[%s175 + $0x4] sm:$0xf] %vm304, %v301
        %p307 = scmp.lt.s32.totalorder %s17, 7
        %s308 = scalar_select %p307, %s17, 7
        %s309 = smul.addr %s308, 2
        %s310 = smul.addr %s309, 4
        %s311 = scalar_lea.vmem %s2, %s310
        // Predicated region
        $region37: #{tpu_custom_call.1} parent=27 // pred_check
          %p312 = pneg %p82
        $region38: #{tpu_custom_call.1} parent=27 // pred_check_branch
          %314 = sbr.rel (%p312) target = $region40
        $region39: #{tpu_custom_call.1} parent=27 // pred_region
          _
        $region40: #{tpu_custom_call.1} parent=27 // pred_fallthru
          _
      $region28: #{tpu_custom_call.1} parent=5 // pred_fallthru
        _
      %p315 = scmp.le.s32.totalorder 2, %s12
      // Predicated region
      $region41: #{tpu_custom_call.1} parent=5 // pred_check
        %p316 = pneg %p315
      $region42: #{tpu_custom_call.1} parent=5 // pred_check_branch
        %318 = sbr.rel (%p316) target = $region44
      $region43: #{tpu_custom_call.1} parent=5 // pred_region
        %s319 = ssub.s32 %s12, 2
        // Predicated region
        $region45: #{tpu_custom_call.1} parent=43 // pred_check
          %p320 = pneg %p88
        $region46: #{tpu_custom_call.1} parent=43 // pred_check_branch
          %322 = sbr.rel (%p320) target = $region48
        $region47: #{tpu_custom_call.1} parent=43 // pred_region
          %p323 = scmp.lt.s32.totalorder %s18, 7
          %s324 = scalar_select %p323, %s18, 7
          %s325 = smul.addr %s324, 2
          %s326 = smul.addr %s325, 4
          %s327 = scalar_lea.vmem %s2, %s326
        $region48: #{tpu_custom_call.1} parent=43 // pred_fallthru
          _
      $region44: #{tpu_custom_call.1} parent=5 // pred_fallthru
        _
    $region6: #{tpu_custom_call.1} parent=1 // loop_footer
      %s16 = sadd.s32 1, %s12
    $region7: #{tpu_custom_call.1} parent=1 // loop_footer_branch
      %11 = sbr.rel target = $region3
    $region8: #{tpu_custom_call.1} parent=1 // loop_exit
      _
    %328 = vsyncpa [#allocation3], 1
    %s329 = scalar_lea.sflag [#allocation3], 1
    %330 = vsyncpa %s329, 1
    %331 = vsyncpa [#allocation5], 1

</llo_original>
